<compile_context>
chip_gen: v6e
topology: v6e:2x2x1
jax: 0.10.0
libtpu: 0.0.40
codegen_flags: <defaults>
</compile_context>

<pallas_src>
import jax
import jax.numpy as jnp
from jax.experimental import pallas as pl
from jax.experimental.pallas import tpu as pltpu

TB_MAX = 1024  # max batch-tile rows; comfortably inside scoped VMEM on v5e/v6e/v7x


def _round_up(x, m):
    return ((x + m - 1) // m) * m


def _cdiv(a, b):
    return (a + b - 1) // b


# --------------------------------------------------------------------------- #
# Kernel
# --------------------------------------------------------------------------- #
def _ae_kernel(x_ref,
               w1_ref, b1_ref, w2_ref, b2_ref, w3_ref, b3_ref,
               w34_ref, b34_ref, w5_ref, b5_ref, w6_ref, b6_ref,
               enc_ref, dec_ref):
    """One (tb, input_dim) batch tile -> (tb, latent_dim) enc + (tb, input_dim) dec."""
    cdt = x_ref.dtype  # MXU input dtype (bf16 by default)

    def mm(a, w_ref):
        # Weights are already in compute dtype (no per-step casts); f32 accumulation.
        return jnp.dot(a, w_ref[...], preferred_element_type=jnp.float32)

    x = x_ref[...]

    # ------------------------------ encoder ------------------------------
    h = jnp.maximum(mm(x, w1_ref) + b1_ref[...], 0.0).astype(cdt)
    h = jnp.maximum(mm(h, w2_ref) + b2_ref[...], 0.0).astype(cdt)
    z = mm(h, w3_ref) + b3_ref[...]                    # (tb, latent_dim), narrow store
    enc_ref[...] = z.astype(enc_ref.dtype)

    # ------------------------------ decoder ------------------------------
    # Decoder layer 1 (latent_dim -> 256) is folded into the host-precomputed
    # w34 = w3 @ w4, b34 = b3 @ w4 + b4: one regular 256x256 MXU pass from h
    # instead of a near-empty K=latent_dim matmul / cross-lane outer product.
    d = jnp.maximum(mm(h, w34_ref) + b34_ref[...], 0.0).astype(cdt)
    d = jnp.maximum(mm(d, w5_ref) + b5_ref[...], 0.0).astype(cdt)
    d = mm(d, w6_ref) + b6_ref[...]
    dec_ref[...] = jnp.tanh(d).astype(dec_ref.dtype)


# --------------------------------------------------------------------------- #
# Host-side weight preparation (done once, outside the per-call path)
# --------------------------------------------------------------------------- #
def prepare_params(params, compute_dtype=jnp.bfloat16):
    """Fold decoder layer 1 into w34/b34 and cast matmul weights to the MXU
    compute dtype (biases stay f32)."""
    f32 = jnp.float32
    w3 = params["w3"].astype(f32)
    w4 = params["w4"].astype(f32)
    b3 = params["b3"].astype(f32).reshape(1, -1)
    b4 = params["b4"].astype(f32).reshape(1, -1)
    cdt = compute_dtype
    return {
        "w1": params["w1"].astype(cdt), "b1": params["b1"].astype(f32).reshape(1, -1),
        "w2": params["w2"].astype(cdt), "b2": params["b2"].astype(f32).reshape(1, -1),
        "w3": w3.astype(cdt),           "b3": b3,
        "w34": (w3 @ w4).astype(cdt),   "b34": b3 @ w4 + b4,
        "w5": params["w5"].astype(cdt), "b5": params["b5"].astype(f32).reshape(1, -1),
        "w6": params["w6"].astype(cdt), "b6": params["b6"].astype(f32).reshape(1, -1),
    }


# --------------------------------------------------------------------------- #
# Forward wrappers
# --------------------------------------------------------------------------- #
def triplet_autoencoder_forward(x, prepared):
    """x: (batch, input_dim) f32.  prepared: output of prepare_params."""
    batch, input_dim = x.shape
    assert input_dim == prepared["w1"].shape[0]
    latent_dim = prepared["w3"].shape[1]
    hidden1 = prepared["w1"].shape[1]
    hidden2 = prepared["w2"].shape[1]
    cdt = prepared["w1"].dtype

    # ---- batch tiling: minimize padding; >= 2 tiles for large batches (v7x) ----
    sub = _round_up(max(batch, 1), 8)            # sublane-rounded batch
    n_tiles = _cdiv(sub, TB_MAX)
    if sub >= 256:                               # large enough to split across 2 TCs
        n_tiles = max(n_tiles, 2)
    tb = _round_up(_cdiv(sub, n_tiles), 8)
    grid_len = _cdiv(sub, tb)
    padded_batch = grid_len * tb

    x_p = x.astype(cdt)
    if padded_batch != batch:
        x_p = jnp.pad(x_p, ((0, padded_batch - batch), (0, 0)))

    weights = (prepared["w1"], prepared["b1"], prepared["w2"], prepared["b2"],
               prepared["w3"], prepared["b3"], prepared["w34"], prepared["b34"],
               prepared["w5"], prepared["b5"], prepared["w6"], prepared["b6"])

    def act_spec(cols):
        # Last block dim equals the full array dim -> legal and contiguous DMA.
        return pl.BlockSpec((tb, cols), lambda i: (i, 0))

    def resident_spec(arr):
        # Whole array as one grid-invariant block: DMA'd to VMEM once and kept
        # resident across all batch tiles.
        nd = arr.ndim
        return pl.BlockSpec(arr.shape, lambda i, _nd=nd: (0,) * _nd)

    in_specs = [act_spec(input_dim)] + [resident_spec(w) for w in weights]
    out_specs = (act_spec(latent_dim), act_spec(input_dim))

    flops = 2 * padded_batch * (input_dim * hidden1 + hidden1 * hidden2
                                + hidden2 * latent_dim + hidden2 * hidden2
                                + hidden2 * hidden1 + hidden1 * input_dim)
    bytes_accessed = (int(x_p.size) * x_p.dtype.itemsize
                      + sum(int(w.size) * w.dtype.itemsize for w in weights)
                      + 4 * padded_batch * (latent_dim + input_dim))
    cost = pl.CostEstimate(flops=int(flops),
                           transcendentals=int(padded_batch * input_dim),
                           bytes_accessed=int(bytes_accessed))

    enc_p, dec_p = pl.pallas_call(
        _ae_kernel,
        grid=(grid_len,),
        in_specs=in_specs,
        out_specs=out_specs,
        out_shape=(
            jax.ShapeDtypeStruct((padded_batch, latent_dim), jnp.float32),
            jax.ShapeDtypeStruct((padded_batch, input_dim), jnp.float32),
        ),
        compiler_params=pltpu.CompilerParams(
            dimension_semantics=("parallel",)),
        cost_estimate=cost,
    )(x_p, *weights)

    if padded_batch != batch:
        enc_p = enc_p[:batch]
        dec_p = dec_p[:batch]
    return enc_p, dec_p


def triplet_forward(anchor, positive, negative, prepared):
    """Fused triplet forward: one pallas_call over the concatenated batch."""
    n = anchor.shape[0]
    x = jnp.concatenate([anchor, positive, negative], axis=0)
    enc, dec = triplet_autoencoder_forward(x, prepared)
    return ((enc[:n], dec[:n]),
            (enc[n:2 * n], dec[n:2 * n]),
            (enc[2 * n:3 * n], dec[2 * n:3 * n]))


# --------------------------------------------------------------------------- #
# Reference / init (for the self-test)
# --------------------------------------------------------------------------- #
def init_params(key, input_dim, latent_dim=2):
    """Deterministic synthetic init matching nn.Linear shapes (stored as (in, out))."""
    dims = [
        (input_dim, 128),    # encoder[0]
        (128, 256),          # encoder[2]
        (256, latent_dim),   # encoder[4]
        (latent_dim, 256),   # decoder[0]
        (256, 128),          # decoder[2]
        (128, input_dim),    # decoder[4]
    ]
    params = {}
    for i, (fan_in, fan_out) in enumerate(dims, start=1):
        key, kw, kb = jax.random.split(key, 3)
        bound = 1.0 / jnp.sqrt(jnp.float32(fan_in))
        params[f"w{i}"] = jax.random.uniform(
            kw, (fan_in, fan_out), jnp.float32, -bound, bound)
        params[f"b{i}"] = jax.random.uniform(
            kb, (1, fan_out), jnp.float32, -bound, bound)
    return params


def _reference_forward(x, p, compute_dtype=jnp.bfloat16):
    # Pure-JAX reference mirroring the module semantics (bf16 MXU inputs,
    # f32 accumulation); decoder layer 1 kept un-fused at f32 precision.
    def mm(a, w):
        return jnp.dot(a.astype(compute_dtype), w.astype(compute_dtype),
                       preferred_element_type=jnp.float32)
    h = jax.nn.relu(mm(x, p["w1"]) + p["b1"])
    h = jax.nn.relu(mm(h, p["w2"]) + p["b2"])
    z = mm(h, p["w3"]) + p["b3"]
    d = jax.nn.relu(jnp.dot(z, p["w4"], precision=jax.lax.Precision.HIGHEST) + p["b4"])
    d = jax.nn.relu(mm(d, p["w5"]) + p["b5"])
    d = jnp.tanh(mm(d, p["w6"]) + p["b6"])
    return z, d


if __name__ == "__main__":
    key = jax.random.PRNGKey(0)
    input_dim, latent_dim = 16, 2

    key, kp, kx, ka, kpos, kn = jax.random.split(key, 6)
    params = init_params(kp, input_dim, latent_dim)
    prepared = prepare_params(params)            # one-time weight prep / fusion

    # Small batch (single tile).
    batch = 8
    x = jax.random.normal(kx, (batch, input_dim), jnp.float32)
    enc, dec = jax.block_until_ready(triplet_autoencoder_forward(x, prepared))
    enc_ref, dec_ref = _reference_forward(x, params)
    assert enc.shape == (batch, latent_dim) and dec.shape == (batch, input_dim)
    assert jnp.allclose(enc, enc_ref, atol=2e-2, rtol=2e-2)
    assert jnp.allclose(dec, dec_ref, atol=3e-2, rtol=3e-2)

    # Fused triplet forward over a larger, non-multiple batch (tiled, parallel grid).
    nb = 300
    anchor = jax.random.normal(ka, (nb, input_dim), jnp.float32)
    positive = jax.random.normal(kpos, (nb, input_dim), jnp.float32)
    negative = jax.random.normal(kn, (nb, input_dim), jnp.float32)
    results = jax.block_until_ready(
        triplet_forward(anchor, positive, negative, prepared))
    for xi, (ei, di) in zip((anchor, positive, negative), results):
        er, dr = _reference_forward(xi, params)
        assert ei.shape == (nb, latent_dim) and di.shape == (nb, input_dim)
        assert jnp.allclose(ei, er, atol=2e-2, rtol=2e-2)
        assert jnp.allclose(di, dr, atol=3e-2, rtol=3e-2)

    print("KERNEL_OK")
</pallas_src>

<mosaic_0001>
module attributes {stable_mosaic.version = 11 : i64} {
  func.func @_ae_kernel(%arg0: i32, %arg1: memref<8x16xbf16, #tpu.memory_space<vmem>>, %arg2: memref<16x128xbf16, #tpu.memory_space<vmem>>, %arg3: memref<1x128xf32, #tpu.memory_space<vmem>>, %arg4: memref<128x256xbf16, #tpu.memory_space<vmem>>, %arg5: memref<1x256xf32, #tpu.memory_space<vmem>>, %arg6: memref<256x2xbf16, #tpu.memory_space<vmem>>, %arg7: memref<1x2xf32, #tpu.memory_space<vmem>>, %arg8: memref<256x256xbf16, #tpu.memory_space<vmem>>, %arg9: memref<1x256xf32, #tpu.memory_space<vmem>>, %arg10: memref<256x128xbf16, #tpu.memory_space<vmem>>, %arg11: memref<1x128xf32, #tpu.memory_space<vmem>>, %arg12: memref<128x16xbf16, #tpu.memory_space<vmem>>, %arg13: memref<1x16xf32, #tpu.memory_space<vmem>>, %arg14: memref<8x2xf32, #tpu.memory_space<vmem>>, %arg15: memref<8x16xf32, #tpu.memory_space<vmem>>) attributes {dimension_semantics = [#tpu.dimension_semantics<parallel>], iteration_bounds = array<i64: 1>, scalar_prefetch = 0 : i64, scratch_operands = 0 : i64, tpu.core_type = #tpu.core_type<tc>, window_params = [{transform_indices = @transform_0, window_bounds = array<i64: 8, 16>}, {pipeline_mode = #tpu.pipeline_mode<synchronous>, transform_indices = @transform_1, window_bounds = array<i64: 16, 128>}, {pipeline_mode = #tpu.pipeline_mode<synchronous>, transform_indices = @transform_2, window_bounds = array<i64: 1, 128>}, {pipeline_mode = #tpu.pipeline_mode<synchronous>, transform_indices = @transform_3, window_bounds = array<i64: 128, 256>}, {pipeline_mode = #tpu.pipeline_mode<synchronous>, transform_indices = @transform_4, window_bounds = array<i64: 1, 256>}, {pipeline_mode = #tpu.pipeline_mode<synchronous>, transform_indices = @transform_5, window_bounds = array<i64: 256, 2>}, {pipeline_mode = #tpu.pipeline_mode<synchronous>, transform_indices = @transform_6, window_bounds = array<i64: 1, 2>}, {pipeline_mode = #tpu.pipeline_mode<synchronous>, transform_indices = @transform_7, window_bounds = array<i64: 256, 256>}, {pipeline_mode = #tpu.pipeline_mode<synchronous>, transform_indices = @transform_8, window_bounds = array<i64: 1, 256>}, {pipeline_mode = #tpu.pipeline_mode<synchronous>, transform_indices = @transform_9, window_bounds = array<i64: 256, 128>}, {pipeline_mode = #tpu.pipeline_mode<synchronous>, transform_indices = @transform_10, window_bounds = array<i64: 1, 128>}, {pipeline_mode = #tpu.pipeline_mode<synchronous>, transform_indices = @transform_11, window_bounds = array<i64: 128, 16>}, {pipeline_mode = #tpu.pipeline_mode<synchronous>, transform_indices = @transform_12, window_bounds = array<i64: 1, 16>}, {transform_indices = @transform_13, window_bounds = array<i64: 8, 2>}, {transform_indices = @transform_14, window_bounds = array<i64: 8, 16>}]} {
    %c0 = arith.constant 0 : index
    %c0_0 = arith.constant 0 : index
    %0 = vector.load %arg1[%c0, %c0_0] : memref<8x16xbf16, #tpu.memory_space<vmem>>, vector<8x16xbf16>
    %c0_1 = arith.constant 0 : index
    %c0_2 = arith.constant 0 : index
    %1 = vector.load %arg2[%c0_1, %c0_2] : memref<16x128xbf16, #tpu.memory_space<vmem>>, vector<16x128xbf16>
    %cst = arith.constant dense<0.000000e+00> : vector<8x128xf32>
    %2 = tpu.matmul %0, %1, %cst {dimension_numbers = #tpu.dot_dimension_numbers<[1], [0], [0], [1], [0, 0, 1, 1], [], []>} : vector<8x16xbf16>, vector<16x128xbf16>, vector<8x128xf32> -> vector<8x128xf32>
    %c0_3 = arith.constant 0 : index
    %c0_4 = arith.constant 0 : index
    %3 = vector.load %arg3[%c0_3, %c0_4] : memref<1x128xf32, #tpu.memory_space<vmem>>, vector<1x128xf32>
    %4 = vector.broadcast %3 : vector<1x128xf32> to vector<8x128xf32>
    %5 = arith.addf %2, %4 : vector<8x128xf32>
    %cst_5 = arith.constant 0.000000e+00 : f32
    %6 = vector.broadcast %cst_5 : f32 to vector<8x128xf32>
    %7 = arith.maximumf %5, %6 : vector<8x128xf32>
    %8 = arith.truncf %7 : vector<8x128xf32> to vector<8x128xbf16>
    %c0_6 = arith.constant 0 : index
    %c0_7 = arith.constant 0 : index
    %9 = vector.load %arg4[%c0_6, %c0_7] : memref<128x256xbf16, #tpu.memory_space<vmem>>, vector<128x256xbf16>
    %cst_8 = arith.constant dense<0.000000e+00> : vector<8x256xf32>
    %10 = tpu.matmul %8, %9, %cst_8 {dimension_numbers = #tpu.dot_dimension_numbers<[1], [0], [0], [1], [0, 0, 1, 1], [], []>} : vector<8x128xbf16>, vector<128x256xbf16>, vector<8x256xf32> -> vector<8x256xf32>
    %c0_9 = arith.constant 0 : index
    %c0_10 = arith.constant 0 : index
    %11 = vector.load %arg5[%c0_9, %c0_10] : memref<1x256xf32, #tpu.memory_space<vmem>>, vector<1x256xf32>
    %12 = vector.broadcast %11 : vector<1x256xf32> to vector<8x256xf32>
    %13 = arith.addf %10, %12 : vector<8x256xf32>
    %cst_11 = arith.constant 0.000000e+00 : f32
    %14 = vector.broadcast %cst_11 : f32 to vector<8x256xf32>
    %15 = arith.maximumf %13, %14 : vector<8x256xf32>
    %16 = arith.truncf %15 : vector<8x256xf32> to vector<8x256xbf16>
    %c0_12 = arith.constant 0 : index
    %c0_13 = arith.constant 0 : index
    %17 = vector.load %arg6[%c0_12, %c0_13] : memref<256x2xbf16, #tpu.memory_space<vmem>>, vector<256x2xbf16>
    %cst_14 = arith.constant dense<0.000000e+00> : vector<8x2xf32>
    %18 = tpu.matmul %16, %17, %cst_14 {dimension_numbers = #tpu.dot_dimension_numbers<[1], [0], [0], [1], [0, 0, 1, 1], [], []>} : vector<8x256xbf16>, vector<256x2xbf16>, vector<8x2xf32> -> vector<8x2xf32>
    %c0_15 = arith.constant 0 : index
    %c0_16 = arith.constant 0 : index
    %19 = vector.load %arg7[%c0_15, %c0_16] : memref<1x2xf32, #tpu.memory_space<vmem>>, vector<1x2xf32>
    %20 = vector.broadcast %19 : vector<1x2xf32> to vector<8x2xf32>
    %21 = arith.addf %18, %20 : vector<8x2xf32>
    %c0_17 = arith.constant 0 : index
    %c0_18 = arith.constant 0 : index
    %22 = vector.load %arg14[%c0_17, %c0_18] : memref<8x2xf32, #tpu.memory_space<vmem>>, vector<8x2xf32>
    tpu.vector_store %arg14[%c0_17, %c0_18], %21 {strides = array<i32>} : memref<8x2xf32, #tpu.memory_space<vmem>>, vector<8x2xf32>,
    %c0_19 = arith.constant 0 : index
    %c0_20 = arith.constant 0 : index
    %23 = vector.load %arg8[%c0_19, %c0_20] : memref<256x256xbf16, #tpu.memory_space<vmem>>, vector<256x256xbf16>
    %cst_21 = arith.constant dense<0.000000e+00> : vector<8x256xf32>
    %24 = tpu.matmul %16, %23, %cst_21 {dimension_numbers = #tpu.dot_dimension_numbers<[1], [0], [0], [1], [0, 0, 1, 1], [], []>} : vector<8x256xbf16>, vector<256x256xbf16>, vector<8x256xf32> -> vector<8x256xf32>
    %c0_22 = arith.constant 0 : index
    %c0_23 = arith.constant 0 : index
    %25 = vector.load %arg9[%c0_22, %c0_23] : memref<1x256xf32, #tpu.memory_space<vmem>>, vector<1x256xf32>
    %26 = vector.broadcast %25 : vector<1x256xf32> to vector<8x256xf32>
    %27 = arith.addf %24, %26 : vector<8x256xf32>
    %cst_24 = arith.constant 0.000000e+00 : f32
    %28 = vector.broadcast %cst_24 : f32 to vector<8x256xf32>
    %29 = arith.maximumf %27, %28 : vector<8x256xf32>
    %30 = arith.truncf %29 : vector<8x256xf32> to vector<8x256xbf16>
    %c0_25 = arith.constant 0 : index
    %c0_26 = arith.constant 0 : index
    %31 = vector.load %arg10[%c0_25, %c0_26] : memref<256x128xbf16, #tpu.memory_space<vmem>>, vector<256x128xbf16>
    %cst_27 = arith.constant dense<0.000000e+00> : vector<8x128xf32>
    %32 = tpu.matmul %30, %31, %cst_27 {dimension_numbers = #tpu.dot_dimension_numbers<[1], [0], [0], [1], [0, 0, 1, 1], [], []>} : vector<8x256xbf16>, vector<256x128xbf16>, vector<8x128xf32> -> vector<8x128xf32>
    %c0_28 = arith.constant 0 : index
    %c0_29 = arith.constant 0 : index
    %33 = vector.load %arg11[%c0_28, %c0_29] : memref<1x128xf32, #tpu.memory_space<vmem>>, vector<1x128xf32>
    %34 = vector.broadcast %33 : vector<1x128xf32> to vector<8x128xf32>
    %35 = arith.addf %32, %34 : vector<8x128xf32>
    %cst_30 = arith.constant 0.000000e+00 : f32
    %36 = vector.broadcast %cst_30 : f32 to vector<8x128xf32>
    %37 = arith.maximumf %35, %36 : vector<8x128xf32>
    %38 = arith.truncf %37 : vector<8x128xf32> to vector<8x128xbf16>
    %c0_31 = arith.constant 0 : index
    %c0_32 = arith.constant 0 : index
    %39 = vector.load %arg12[%c0_31, %c0_32] : memref<128x16xbf16, #tpu.memory_space<vmem>>, vector<128x16xbf16>
    %cst_33 = arith.constant dense<0.000000e+00> : vector<8x16xf32>
    %40 = tpu.matmul %38, %39, %cst_33 {dimension_numbers = #tpu.dot_dimension_numbers<[1], [0], [0], [1], [0, 0, 1, 1], [], []>} : vector<8x128xbf16>, vector<128x16xbf16>, vector<8x16xf32> -> vector<8x16xf32>
    %c0_34 = arith.constant 0 : index
    %c0_35 = arith.constant 0 : index
    %41 = vector.load %arg13[%c0_34, %c0_35] : memref<1x16xf32, #tpu.memory_space<vmem>>, vector<1x16xf32>
    %42 = vector.broadcast %41 : vector<1x16xf32> to vector<8x16xf32>
    %43 = arith.addf %40, %42 : vector<8x16xf32>
    %44 = math.tanh %43 : vector<8x16xf32>
    %c0_36 = arith.constant 0 : index
    %c0_37 = arith.constant 0 : index
    %45 = vector.load %arg15[%c0_36, %c0_37] : memref<8x16xf32, #tpu.memory_space<vmem>>, vector<8x16xf32>
    tpu.vector_store %arg15[%c0_36, %c0_37], %44 {strides = array<i32>} : memref<8x16xf32, #tpu.memory_space<vmem>>, vector<8x16xf32>,
    return
  }
  func.func @transform_0(%arg0: i32) -> (i32, i32) {
    %c0_i32 = arith.constant 0 : i32
    %c0_i32_0 = arith.constant 0 : i32
    return %arg0, %c0_i32 : i32, i32
  }
  func.func @transform_1(%arg0: i32) -> (i32, i32) {
    %c0_i32 = arith.constant 0 : i32
    %c0_i32_0 = arith.constant 0 : i32
    %c0_i32_1 = arith.constant 0 : i32
    return %c0_i32, %c0_i32_0 : i32, i32
  }
  func.func @transform_2(%arg0: i32) -> (i32, i32) {
    %c0_i32 = arith.constant 0 : i32
    %c0_i32_0 = arith.constant 0 : i32
    %c0_i32_1 = arith.constant 0 : i32
    return %c0_i32, %c0_i32_0 : i32, i32
  }
  func.func @transform_3(%arg0: i32) -> (i32, i32) {
    %c0_i32 = arith.constant 0 : i32
    %c0_i32_0 = arith.constant 0 : i32
    %c0_i32_1 = arith.constant 0 : i32
    return %c0_i32, %c0_i32_0 : i32, i32
  }
  func.func @transform_4(%arg0: i32) -> (i32, i32) {
    %c0_i32 = arith.constant 0 : i32
    %c0_i32_0 = arith.constant 0 : i32
    %c0_i32_1 = arith.constant 0 : i32
    return %c0_i32, %c0_i32_0 : i32, i32
  }
  func.func @transform_5(%arg0: i32) -> (i32, i32) {
    %c0_i32 = arith.constant 0 : i32
    %c0_i32_0 = arith.constant 0 : i32
    %c0_i32_1 = arith.constant 0 : i32
    return %c0_i32, %c0_i32_0 : i32, i32
  }
  func.func @transform_6(%arg0: i32) -> (i32, i32) {
    %c0_i32 = arith.constant 0 : i32
    %c0_i32_0 = arith.constant 0 : i32
    %c0_i32_1 = arith.constant 0 : i32
    return %c0_i32, %c0_i32_0 : i32, i32
  }
  func.func @transform_7(%arg0: i32) -> (i32, i32) {
    %c0_i32 = arith.constant 0 : i32
    %c0_i32_0 = arith.constant 0 : i32
    %c0_i32_1 = arith.constant 0 : i32
    return %c0_i32, %c0_i32_0 : i32, i32
  }
  func.func @transform_8(%arg0: i32) -> (i32, i32) {
    %c0_i32 = arith.constant 0 : i32
    %c0_i32_0 = arith.constant 0 : i32
    %c0_i32_1 = arith.constant 0 : i32
    return %c0_i32, %c0_i32_0 : i32, i32
  }
  func.func @transform_9(%arg0: i32) -> (i32, i32) {
    %c0_i32 = arith.constant 0 : i32
    %c0_i32_0 = arith.constant 0 : i32
    %c0_i32_1 = arith.constant 0 : i32
    return %c0_i32, %c0_i32_0 : i32, i32
  }
  func.func @transform_10(%arg0: i32) -> (i32, i32) {
    %c0_i32 = arith.constant 0 : i32
    %c0_i32_0 = arith.constant 0 : i32
    %c0_i32_1 = arith.constant 0 : i32
    return %c0_i32, %c0_i32_0 : i32, i32
  }
  func.func @transform_11(%arg0: i32) -> (i32, i32) {
    %c0_i32 = arith.constant 0 : i32
    %c0_i32_0 = arith.constant 0 : i32
    %c0_i32_1 = arith.constant 0 : i32
    return %c0_i32, %c0_i32_0 : i32, i32
  }
  func.func @transform_12(%arg0: i32) -> (i32, i32) {
    %c0_i32 = arith.constant 0 : i32
    %c0_i32_0 = arith.constant 0 : i32
    %c0_i32_1 = arith.constant 0 : i32
    return %c0_i32, %c0_i32_0 : i32, i32
  }
  func.func @transform_13(%arg0: i32) -> (i32, i32) {
    %c0_i32 = arith.constant 0 : i32
    %c0_i32_0 = arith.constant 0 : i32
    return %arg0, %c0_i32 : i32, i32
  }
  func.func @transform_14(%arg0: i32) -> (i32, i32) {
    %c0_i32 = arith.constant 0 : i32
    %c0_i32_0 = arith.constant 0 : i32
    return %arg0, %c0_i32 : i32, i32
  }
}

</mosaic_0001>

<llo_original>
// kernel: tpu_custom_call.1
$region0: #{tpu_custom_call.1}
  #allocation0 [shape = 'u32[]', space=smem, size = 0x4, offset = 0x4, fixed_abs, tag = 'smem constant byte address 0x4 - core index']
  #allocation1 [shape = 'u32[144,128]{1,0:T(1,128)}', space=vmem, size = 0x12000, scoped, tag = 'internal scratch']
  %s0 = inlined_call_operand.vmem [shape: bf16[8,16], index: 0, kind: input, shape index: {}]
  %s1 = inlined_call_operand.vmem [shape: bf16[16,128], index: 1, kind: input, shape index: {}]
  %s2 = inlined_call_operand.vmem [shape: f32[1,128], index: 2, kind: input, shape index: {}]
  %s3 = inlined_call_operand.vmem [shape: bf16[128,256], index: 3, kind: input, shape index: {}]
  %s4 = inlined_call_operand.vmem [shape: f32[1,256], index: 4, kind: input, shape index: {}]
  %s5 = inlined_call_operand.vmem [shape: bf16[256,2], index: 5, kind: input, shape index: {}]
  %s6 = inlined_call_operand.vmem [shape: f32[1,2], index: 6, kind: input, shape index: {}]
  %s7 = inlined_call_operand.hbm [shape: bf16[256,256], index: 7, kind: input, shape index: {}]
  %s8 = inlined_call_operand.vmem [shape: f32[1,256], index: 8, kind: input, shape index: {}]
  %s9 = inlined_call_operand.hbm [shape: bf16[256,128], index: 9, kind: input, shape index: {}]
  %s10 = inlined_call_operand.vmem [shape: f32[1,128], index: 10, kind: input, shape index: {}]
  %s11 = inlined_call_operand.vmem [shape: bf16[128,16], index: 11, kind: input, shape index: {}]
  %s12 = inlined_call_operand.vmem [shape: f32[1,16], index: 12, kind: input, shape index: {}]
  %s13 = inlined_call_operand.vmem [shape: f32[8,2], index: 13, kind: output, shape index: {0}]
  %s14 = inlined_call_operand.hbm [shape: f32[8,16], index: 14, kind: output, shape index: {1}]
  %15 = xla_tuple %s13, %s14
  %s16 = sld [smem:[#allocation0]]
  $region78: #{tpu_custom_call.1} parent=0
    _
  %s18 = ssub.s32 1, %s16
  %s19 = scalar_select 0, %s18, %s16
  $region1: #{tpu_custom_call.1} parent=0
    #allocation2 [shape = 'u8[131072]{0}', space=vmem, size = 0x20000, scoped, tag = 'input window, operand 7, single buffered']
    #allocation3 [shape = 's32[1]{0}', space=sflag, size = 0x4, scoped, tag = 'scoped memory for tpu_custom_call.1']
    #allocation4 [shape = 's32[1]{0}', space=sflag, size = 0x4, scoped, tag = 'scoped memory for tpu_custom_call.1']
    #allocation5 [shape = 'u8[65536]{0}', space=vmem, size = 0x10000, scoped, tag = 'input window, operand 9, single buffered']
    #allocation6 [shape = 's32[1]{0}', space=sflag, size = 0x4, scoped, tag = 'scoped memory for tpu_custom_call.1']
    #allocation7 [shape = 'u8[4096]{0}', space=vmem, size = 0x1000, scoped, tag = 'output window, operand 1, single buffered']
    %20 = vsyncpa [#allocation3], 0
    %21 = vsyncpa [#allocation6], 0
    %22 = vsyncpa [#allocation4], 0
    // Predicated region
    $region2: #{tpu_custom_call.1} parent=1 // pred_check
      _
    $region3: #{tpu_custom_call.1} parent=1 // pred_check_branch
      %24 = sbr.rel (0) target = $region5
    $region4: #{tpu_custom_call.1} parent=1 // pred_region
      _
    $region5: #{tpu_custom_call.1} parent=1 // pred_fallthru
      _
    // Predicated region
    $region6: #{tpu_custom_call.1} parent=1 // pred_check
      _
    $region7: #{tpu_custom_call.1} parent=1 // pred_check_branch
      %26 = sbr.rel (0) target = $region9
    $region8: #{tpu_custom_call.1} parent=1 // pred_region
      _
    $region9: #{tpu_custom_call.1} parent=1 // pred_fallthru
      _
    // Predicated region
    $region10: #{tpu_custom_call.1} parent=1 // pred_check
      _
    $region11: #{tpu_custom_call.1} parent=1 // pred_check_branch
      %28 = sbr.rel (0) target = $region13
    $region12: #{tpu_custom_call.1} parent=1 // pred_region
      _
    $region13: #{tpu_custom_call.1} parent=1 // pred_fallthru
      _
    // Predicated region
    $region14: #{tpu_custom_call.1} parent=1 // pred_check
      _
    $region15: #{tpu_custom_call.1} parent=1 // pred_check_branch
      %30 = sbr.rel (0) target = $region17
    $region16: #{tpu_custom_call.1} parent=1 // pred_region
      _
    $region17: #{tpu_custom_call.1} parent=1 // pred_fallthru
      _
    // Predicated region
    $region18: #{tpu_custom_call.1} parent=1 // pred_check
      _
    $region19: #{tpu_custom_call.1} parent=1 // pred_check_branch
      %32 = sbr.rel (0) target = $region21
    $region20: #{tpu_custom_call.1} parent=1 // pred_region
      _
    $region21: #{tpu_custom_call.1} parent=1 // pred_fallthru
      _
    // Predicated region
    $region22: #{tpu_custom_call.1} parent=1 // pred_check
      _
    $region23: #{tpu_custom_call.1} parent=1 // pred_check_branch
      %34 = sbr.rel (0) target = $region25
    $region24: #{tpu_custom_call.1} parent=1 // pred_region
      _
    $region25: #{tpu_custom_call.1} parent=1 // pred_fallthru
      _
    // Predicated region
    $region26: #{tpu_custom_call.1} parent=1 // pred_check
      _
    $region27: #{tpu_custom_call.1} parent=1 // pred_check_branch
      %36 = sbr.rel (0) target = $region29
    $region28: #{tpu_custom_call.1} parent=1 // pred_region
      _
    $region29: #{tpu_custom_call.1} parent=1 // pred_fallthru
      _
    // Predicated region
    $region30: #{tpu_custom_call.1} parent=1 // pred_check
      _
    $region31: #{tpu_custom_call.1} parent=1 // pred_check_branch
      %38 = sbr.rel (0) target = $region33
    $region32: #{tpu_custom_call.1} parent=1 // pred_region
      %s40 = ssub.s32 4096, 4096
      %41 = vsyncadd [#allocation3], %s40
      %s42 = sshll.u32 [#allocation2], 4
      %s43 = int_to_ptr.vmem [resolvable:$true] %s42
      %48 = dma.hbm_to_vmem [thread:$0]  %s7, 4096, %s43, [#allocation3], 128, 128, 8
    $region33: #{tpu_custom_call.1} parent=1 // pred_fallthru
      _
    // Predicated region
    $region34: #{tpu_custom_call.1} parent=1 // pred_check
      _
    $region35: #{tpu_custom_call.1} parent=1 // pred_check_branch
      %50 = sbr.rel (0) target = $region37
    $region36: #{tpu_custom_call.1} parent=1 // pred_region
      _
    $region37: #{tpu_custom_call.1} parent=1 // pred_fallthru
      _
    // Predicated region
    $region38: #{tpu_custom_call.1} parent=1 // pred_check
      _
    $region39: #{tpu_custom_call.1} parent=1 // pred_check_branch
      %52 = sbr.rel (0) target = $region41
    $region40: #{tpu_custom_call.1} parent=1 // pred_region
      %s54 = ssub.s32 2048, 2048
      %55 = vsyncadd [#allocation6], %s54
      %s56 = sshll.u32 [#allocation5], 4
      %s57 = int_to_ptr.vmem [resolvable:$true] %s56
      %62 = dma.hbm_to_vmem [thread:$0]  %s9, 2048, %s57, [#allocation6], 64, 64, 4
    $region41: #{tpu_custom_call.1} parent=1 // pred_fallthru
      _
    // Predicated region
    $region42: #{tpu_custom_call.1} parent=1 // pred_check
      _
    $region43: #{tpu_custom_call.1} parent=1 // pred_check_branch
      %64 = sbr.rel (0) target = $region45
    $region44: #{tpu_custom_call.1} parent=1 // pred_region
      _
    $region45: #{tpu_custom_call.1} parent=1 // pred_fallthru
      _
    // Predicated region
    $region46: #{tpu_custom_call.1} parent=1 // pred_check
      _
    $region47: #{tpu_custom_call.1} parent=1 // pred_check_branch
      %66 = sbr.rel (0) target = $region49
    $region48: #{tpu_custom_call.1} parent=1 // pred_region
      _
    $region49: #{tpu_custom_call.1} parent=1 // pred_fallthru
      _
    // Predicated region
    $region50: #{tpu_custom_call.1} parent=1 // pred_check
      _
    $region51: #{tpu_custom_call.1} parent=1 // pred_check_branch
      %68 = sbr.rel (0) target = $region53
    $region52: #{tpu_custom_call.1} parent=1 // pred_region
      _
    $region53: #{tpu_custom_call.1} parent=1 // pred_fallthru
      _
    // Predicated region
    $region54: #{tpu_custom_call.1} parent=1 // pred_check
      _
    $region55: #{tpu_custom_call.1} parent=1 // pred_check_branch
      %70 = sbr.rel (0) target = $region57
    $region56: #{tpu_custom_call.1} parent=1 // pred_region
      %71 = dma.done [#allocation3], 4096
    $region57: #{tpu_custom_call.1} parent=1 // pred_fallthru
      _
    // Predicated region
    $region58: #{tpu_custom_call.1} parent=1 // pred_check
      _
    $region59: #{tpu_custom_call.1} parent=1 // pred_check_branch
      %73 = sbr.rel (0) target = $region61
    $region60: #{tpu_custom_call.1} parent=1 // pred_region
      %74 = dma.done [#allocation6], 2048
    $region61: #{tpu_custom_call.1} parent=1 // pred_fallthru
      _
    %v76 = vld [vmem:[%s0] sm:$0xf]
    %v77 = vld [vmem:[%s1] sm:$0xf]
    %v78 = vld [vmem:[%s1 + $0x4] sm:$0xf]
    %v79 = vld [vmem:[%s2] sm:$0x1]
    %v81 = vlaneseq
    %v82 = vshrl.u32 %v81, 7
    %v83 = vsub.s32 0, %v82
    %v84 = vrot.slane %v79, %v83
    %v88 = vunpack.c.l.b16 %v77
    %v89 = vunpack.c.l.b16 %v78
    %v90 = vpack.c.b16 %v89, %v88
    %vm92 = vcmask 130048
    %v94 = vsel %vm92, %v76, 0
    %96 = vmatprep.subr.bf16.mxu0 0
    %97 = vmatpush1.bf16.msra.mxu0 0
    %98 = vmatprep.subr.bf16.mxu0 0
    %99 = vmatpush1.bf16.msra.mxu0 0
    %100 = vmatprep.subr.bf16.mxu0 0
    %101 = vmatpush1.bf16.msra.mxu0 0
    %102 = vmatprep.subr.bf16.mxu0 0
    %103 = vmatpush1.bf16.msra.mxu0 0
    %104 = vmatprep.subr.bf16.mxu0 0
    %105 = vmatpush1.bf16.msra.mxu0 0
    %106 = vmatprep.subr.bf16.mxu0 0
    %107 = vmatpush1.bf16.msra.mxu0 0
    %108 = vmatprep.subr.bf16.mxu0 0
    %109 = vmatpush1.bf16.msra.mxu0 0
    %110 = vmatprep.subr.bf16.mxu0 0
    %111 = vmatpush1.bf16.msra.mxu0 %v90
    %112 = vmatprep.subr.bf16.mxu0 0
    %113 = vmatpush2.bf16.msra.mxu0 0
    %114 = vmatprep.subr.bf16.mxu0 0
    %115 = vmatpush2.bf16.msra.mxu0 0
    %116 = vmatprep.subr.bf16.mxu0 0
    %117 = vmatpush2.bf16.msra.mxu0 0
    %118 = vmatprep.subr.bf16.mxu0 0
    %119 = vmatpush2.bf16.msra.mxu0 0
    %120 = vmatprep.subr.bf16.mxu0 0
    %121 = vmatpush2.bf16.msra.mxu0 0
    %122 = vmatprep.subr.bf16.mxu0 0
    %123 = vmatpush2.bf16.msra.mxu0 0
    %124 = vmatprep.subr.bf16.mxu0 0
    %125 = vmatpush2.bf16.msra.mxu0 0
    %126 = vmatprep.subr.bf16.mxu0 0
    %127 = vmatpush2.bf16.msra.mxu0 0
    %128 = vmatprep.mubr.bf16.mxu0 0
    %129 = vmatmul.mubr.bf16.gmra.mxu0 %v94
    %v130 = vpop.f32.mrf.mxu0
    %v131 = vadd.f32 %v84, %v130
    %v132 = vpop.f32.mrf.mxu0
    %v133 = vpop.f32.mrf.mxu0
    %v134 = vpop.f32.mrf.mxu0
    %135 = vdwg.mxu0
    %v136 = vmax.f32 %v131, 0.0
    %v137 = vpack.c.bf16 %v136, %v136
    %v138 = vld [vmem:[%s3] sm:$0xff]
    %v139 = vld [vmem:[%s3 + $0x8] sm:$0xff]
    %v140 = vld [vmem:[%s3 + $0x10] sm:$0xff]
    %v141 = vld [vmem:[%s3 + $0x18] sm:$0xff]
    %v142 = vld [vmem:[%s3 + $0x20] sm:$0xff]
    %v143 = vld [vmem:[%s3 + $0x28] sm:$0xff]
    %v144 = vld [vmem:[%s3 + $0x30] sm:$0xff]
    %v145 = vld [vmem:[%s3 + $0x38] sm:$0xff]
    %v146 = vld [vmem:[%s3 + $0x40] sm:$0xff]
    %v147 = vld [vmem:[%s3 + $0x48] sm:$0xff]
    %v148 = vld [vmem:[%s3 + $0x50] sm:$0xff]
    %v149 = vld [vmem:[%s3 + $0x58] sm:$0xff]
    %v150 = vld [vmem:[%s3 + $0x60] sm:$0xff]
    %v151 = vld [vmem:[%s3 + $0x68] sm:$0xff]
    %v152 = vld [vmem:[%s3 + $0x70] sm:$0xff]
    %v153 = vld [vmem:[%s3 + $0x78] sm:$0xff]
    %v154 = vld [vmem:[%s4] sm:$0x3]
    %v156 = vlaneseq
    %v157 = vshrl.u32 %v156, 7
    %v158 = vsub.s32 0, %v157
    %v159 = vrot.slane %v154, %v158
    %v160 = vlaneseq
    %v161 = vshrl.u32 %v160, 7
    %v162 = vsub.s32 1, %v161
    %v163 = vrot.slane %v154, %v162
    %v182 = vunpack.c.l.b16 %v138
    %v183 = vunpack.c.h.b16 %v138
    %v184 = vunpack.c.l.b16 %v139
    %v185 = vunpack.c.h.b16 %v139
    %v186 = vunpack.c.l.b16 %v140
    %v187 = vunpack.c.h.b16 %v140
    %v188 = vunpack.c.l.b16 %v141
    %v189 = vunpack.c.h.b16 %v141
    %v190 = vunpack.c.l.b16 %v142
    %v191 = vunpack.c.h.b16 %v142
    %v192 = vunpack.c.l.b16 %v143
    %v193 = vunpack.c.h.b16 %v143
    %v194 = vunpack.c.l.b16 %v144
    %v195 = vunpack.c.h.b16 %v144
    %v196 = vunpack.c.l.b16 %v145
    %v197 = vunpack.c.h.b16 %v145
    %v198 = vunpack.c.l.b16 %v146
    %v199 = vunpack.c.h.b16 %v146
    %v200 = vunpack.c.l.b16 %v147
    %v201 = vunpack.c.h.b16 %v147
    %v202 = vunpack.c.l.b16 %v148
    %v203 = vunpack.c.h.b16 %v148
    %v204 = vunpack.c.l.b16 %v149
    %v205 = vunpack.c.h.b16 %v149
    %v206 = vunpack.c.l.b16 %v150
    %v207 = vunpack.c.h.b16 %v150
    %v208 = vunpack.c.l.b16 %v151
    %v209 = vunpack.c.h.b16 %v151
    %v210 = vunpack.c.l.b16 %v152
    %v211 = vunpack.c.h.b16 %v152
    %v212 = vunpack.c.l.b16 %v153
    %v213 = vunpack.c.h.b16 %v153
    %v214 = vpack.c.b16 %v184, %v182
    %v215 = vpack.c.b16 %v185, %v183
    %v216 = vpack.c.b16 %v188, %v186
    %v217 = vpack.c.b16 %v189, %v187
    %v218 = vpack.c.b16 %v192, %v190
    %v219 = vpack.c.b16 %v193, %v191
    %v220 = vpack.c.b16 %v196, %v194
    %v221 = vpack.c.b16 %v197, %v195
    %v222 = vpack.c.b16 %v200, %v198
    %v223 = vpack.c.b16 %v201, %v199
    %v224 = vpack.c.b16 %v204, %v202
    %v225 = vpack.c.b16 %v205, %v203
    %v226 = vpack.c.b16 %v208, %v206
    %v227 = vpack.c.b16 %v209, %v207
    %v228 = vpack.c.b16 %v212, %v210
    %v229 = vpack.c.b16 %v213, %v211
    %246 = vmatprep.subr.bf16.mxu0 %v229
    %247 = vmatpush1.bf16.msra.mxu0 %v228
    %248 = vmatprep.subr.bf16.mxu0 %v227
    %249 = vmatpush1.bf16.msra.mxu0 %v226
    %250 = vmatprep.subr.bf16.mxu0 %v225
    %251 = vmatpush1.bf16.msra.mxu0 %v224
    %252 = vmatprep.subr.bf16.mxu0 %v223
    %253 = vmatpush1.bf16.msra.mxu0 %v222
    %254 = vmatprep.subr.bf16.mxu0 %v221
    %255 = vmatpush1.bf16.msra.mxu0 %v220
    %256 = vmatprep.subr.bf16.mxu0 %v219
    %257 = vmatpush1.bf16.msra.mxu0 %v218
    %258 = vmatprep.subr.bf16.mxu0 %v217
    %259 = vmatpush1.bf16.msra.mxu0 %v216
    %260 = vmatprep.subr.bf16.mxu0 %v215
    %261 = vmatpush1.bf16.msra.mxu0 %v214
    %262 = vmatprep.subr.bf16.mxu0 0
    %263 = vmatpush2.bf16.msra.mxu0 0
    %264 = vmatprep.subr.bf16.mxu0 0
    %265 = vmatpush2.bf16.msra.mxu0 0
    %266 = vmatprep.subr.bf16.mxu0 0
    %267 = vmatpush2.bf16.msra.mxu0 0
    %268 = vmatprep.subr.bf16.mxu0 0
    %269 = vmatpush2.bf16.msra.mxu0 0
    %270 = vmatprep.subr.bf16.mxu0 0
    %271 = vmatpush2.bf16.msra.mxu0 0
    %272 = vmatprep.subr.bf16.mxu0 0
    %273 = vmatpush2.bf16.msra.mxu0 0
    %274 = vmatprep.subr.bf16.mxu0 0
    %275 = vmatpush2.bf16.msra.mxu0 0
    %276 = vmatprep.subr.bf16.mxu0 0
    %277 = vmatpush2.bf16.msra.mxu0 0
    %278 = vmatprep.mubr.bf16.mxu0 0
    %279 = vmatmul.mubr.bf16.gmra.mxu0 %v137
    %v280 = vpop.f32.mrf.mxu0
    %v281 = vadd.f32 %v159, %v280
    %v282 = vpop.f32.mrf.mxu0
    %v283 = vadd.f32 %v163, %v282
    %v284 = vpop.f32.mrf.mxu0
    %v285 = vpop.f32.mrf.mxu0
    %286 = vdwg.mxu0
    %v287 = vmax.f32 %v281, 0.0
    %v288 = vmax.f32 %v283, 0.0
    %v289 = vpack.c.bf16 %v287, %v287
    %v290 = vpack.c.bf16 %v288, %v288
    %v291 = vld [vmem:[%s5] sm:$0xf]
    %v292 = vld [vmem:[%s5 + $0x4] sm:$0xf]
    %v293 = vld [vmem:[%s5 + $0x8] sm:$0xf]
    %v294 = vld [vmem:[%s5 + $0xc] sm:$0xf]
    %v295 = vld [vmem:[%s5 + $0x10] sm:$0xf]
    %v296 = vld [vmem:[%s5 + $0x14] sm:$0xf]
    %v297 = vld [vmem:[%s5 + $0x18] sm:$0xf]
    %v298 = vld [vmem:[%s5 + $0x1c] sm:$0xf]
    %v299 = vld [vmem:[%s5 + $0x20] sm:$0xf]
    %v300 = vld [vmem:[%s5 + $0x24] sm:$0xf]
    %v301 = vld [vmem:[%s5 + $0x28] sm:$0xf]
    %v302 = vld [vmem:[%s5 + $0x2c] sm:$0xf]
    %v303 = vld [vmem:[%s5 + $0x30] sm:$0xf]
    %v304 = vld [vmem:[%s5 + $0x34] sm:$0xf]
    %v305 = vld [vmem:[%s5 + $0x38] sm:$0xf]
    %v306 = vld [vmem:[%s5 + $0x3c] sm:$0xf]
    %v307 = vld [vmem:[%s5 + $0x40] sm:$0xf]
    %v308 = vld [vmem:[%s5 + $0x44] sm:$0xf]
    %v309 = vld [vmem:[%s5 + $0x48] sm:$0xf]
    %v310 = vld [vmem:[%s5 + $0x4c] sm:$0xf]
    %v311 = vld [vmem:[%s5 + $0x50] sm:$0xf]
    %v312 = vld [vmem:[%s5 + $0x54] sm:$0xf]
    %v313 = vld [vmem:[%s5 + $0x58] sm:$0xf]
    %v314 = vld [vmem:[%s5 + $0x5c] sm:$0xf]
    %v315 = vld [vmem:[%s5 + $0x60] sm:$0xf]
    %v316 = vld [vmem:[%s5 + $0x64] sm:$0xf]
    %v317 = vld [vmem:[%s5 + $0x68] sm:$0xf]
    %v318 = vld [vmem:[%s5 + $0x6c] sm:$0xf]
    %v319 = vld [vmem:[%s5 + $0x70] sm:$0xf]
    %v320 = vld [vmem:[%s5 + $0x74] sm:$0xf]
    %v321 = vld [vmem:[%s5 + $0x78] sm:$0xf]
    %v322 = vld [vmem:[%s5 + $0x7c] sm:$0xf]
    %v323 = vld [vmem:[%s6] sm:$0x1]
    %v325 = vlaneseq
    %v326 = vshrl.u32 %v325, 7
    %v327 = vsub.s32 0, %v326
    %v328 = vrot.slane %v323, %v327
    %v362 = vunpack.c.l.b16 %v291
    %v363 = vunpack.c.l.b16 %v292
    %v364 = vunpack.c.l.b16 %v293
    %v365 = vunpack.c.l.b16 %v294
    %v366 = vunpack.c.l.b16 %v295
    %v367 = vunpack.c.l.b16 %v296
    %v368 = vunpack.c.l.b16 %v297
    %v369 = vunpack.c.l.b16 %v298
    %v370 = vunpack.c.l.b16 %v299
    %v371 = vunpack.c.l.b16 %v300
    %v372 = vunpack.c.l.b16 %v301
    %v373 = vunpack.c.l.b16 %v302
    %v374 = vunpack.c.l.b16 %v303
    %v375 = vunpack.c.l.b16 %v304
    %v376 = vunpack.c.l.b16 %v305
    %v377 = vunpack.c.l.b16 %v306
    %v378 = vunpack.c.l.b16 %v307
    %v379 = vunpack.c.l.b16 %v308
    %v380 = vunpack.c.l.b16 %v309
    %v381 = vunpack.c.l.b16 %v310
    %v382 = vunpack.c.l.b16 %v311
    %v383 = vunpack.c.l.b16 %v312
    %v384 = vunpack.c.l.b16 %v313
    %v385 = vunpack.c.l.b16 %v314
    %v386 = vunpack.c.l.b16 %v315
    %v387 = vunpack.c.l.b16 %v316
    %v388 = vunpack.c.l.b16 %v317
    %v389 = vunpack.c.l.b16 %v318
    %v390 = vunpack.c.l.b16 %v319
    %v391 = vunpack.c.l.b16 %v320
    %v392 = vunpack.c.l.b16 %v321
    %v393 = vunpack.c.l.b16 %v322
    %v394 = vpack.c.b16 %v363, %v362
    %v395 = vpack.c.b16 %v365, %v364
    %v396 = vpack.c.b16 %v367, %v366
    %v397 = vpack.c.b16 %v369, %v368
    %v398 = vpack.c.b16 %v371, %v370
    %v399 = vpack.c.b16 %v373, %v372
    %v400 = vpack.c.b16 %v375, %v374
    %v401 = vpack.c.b16 %v377, %v376
    %v402 = vpack.c.b16 %v379, %v378
    %v403 = vpack.c.b16 %v381, %v380
    %v404 = vpack.c.b16 %v383, %v382
    %v405 = vpack.c.b16 %v385, %v384
    %v406 = vpack.c.b16 %v387, %v386
    %v407 = vpack.c.b16 %v389, %v388
    %v408 = vpack.c.b16 %v391, %v390
    %v409 = vpack.c.b16 %v393, %v392
    %426 = vmatprep.subr.bf16.mxu0 0
    %427 = vmatpush1.bf16.msra.mxu0 %v401
    %428 = vmatprep.subr.bf16.mxu0 0
    %429 = vmatpush1.bf16.msra.mxu0 %v400
    %430 = vmatprep.subr.bf16.mxu0 0
    %431 = vmatpush1.bf16.msra.mxu0 %v399
    %432 = vmatprep.subr.bf16.mxu0 0
    %433 = vmatpush1.bf16.msra.mxu0 %v398
    %434 = vmatprep.subr.bf16.mxu0 0
    %435 = vmatpush1.bf16.msra.mxu0 %v397
    %436 = vmatprep.subr.bf16.mxu0 0
    %437 = vmatpush1.bf16.msra.mxu0 %v396
    %438 = vmatprep.subr.bf16.mxu0 0
    %439 = vmatpush1.bf16.msra.mxu0 %v395
    %440 = vmatprep.subr.bf16.mxu0 0
    %441 = vmatpush1.bf16.msra.mxu0 %v394
    %442 = vmatprep.subr.bf16.mxu0 0
    %443 = vmatpush2.bf16.msra.mxu0 %v409
    %444 = vmatprep.subr.bf16.mxu0 0
    %445 = vmatpush2.bf16.msra.mxu0 %v408
    %446 = vmatprep.subr.bf16.mxu0 0
    %447 = vmatpush2.bf16.msra.mxu0 %v407
    %448 = vmatprep.subr.bf16.mxu0 0
    %449 = vmatpush2.bf16.msra.mxu0 %v406
    %450 = vmatprep.subr.bf16.mxu0 0
    %451 = vmatpush2.bf16.msra.mxu0 %v405
    %452 = vmatprep.subr.bf16.mxu0 0
    %453 = vmatpush2.bf16.msra.mxu0 %v404
    %454 = vmatprep.subr.bf16.mxu0 0
    %455 = vmatpush2.bf16.msra.mxu0 %v403
    %456 = vmatprep.subr.bf16.mxu0 0
    %457 = vmatpush2.bf16.msra.mxu0 %v402
    %458 = vmatprep.mubr.bf16.mxu0 %v290
    %459 = vmatmul.mubr.bf16.gmra.mxu0 %v289
    %v460 = vpop.f32.mrf.mxu0
    %v461 = vadd.f32 %v328, %v460
    %v462 = vpop.f32.mrf.mxu0
    %v463 = vpop.f32.mrf.mxu0
    %v464 = vpop.f32.mrf.mxu0
    %465 = vdwg.mxu0
    %vm466 = vcmask 15360
    %467 = vst.msk [vmem:[%s13] sm:$0xff] %vm466, %v461
    %v468 = vld [vmem:[#allocation2] sm:$0xff]
    %v469 = vld [vmem:[#allocation2 + $0x8] sm:$0xff]
    %v470 = vld [vmem:[#allocation2 + $0x10] sm:$0xff]
    %v471 = vld [vmem:[#allocation2 + $0x18] sm:$0xff]
    %v472 = vld [vmem:[#allocation2 + $0x20] sm:$0xff]
    %v473 = vld [vmem:[#allocation2 + $0x28] sm:$0xff]
    %v474 = vld [vmem:[#allocation2 + $0x30] sm:$0xff]
    %v475 = vld [vmem:[#allocation2 + $0x38] sm:$0xff]
    %v476 = vld [vmem:[#allocation2 + $0x40] sm:$0xff]
    %v477 = vld [vmem:[#allocation2 + $0x48] sm:$0xff]
    %v478 = vld [vmem:[#allocation2 + $0x50] sm:$0xff]
    %v479 = vld [vmem:[#allocation2 + $0x58] sm:$0xff]
    %v480 = vld [vmem:[#allocation2 + $0x60] sm:$0xff]
    %v481 = vld [vmem:[#allocation2 + $0x68] sm:$0xff]
    %v482 = vld [vmem:[#allocation2 + $0x70] sm:$0xff]
    %v483 = vld [vmem:[#allocation2 + $0x78] sm:$0xff]
    %v484 = vld [vmem:[#allocation2 + $0x80] sm:$0xff]
    %v485 = vld [vmem:[#allocation2 + $0x88] sm:$0xff]
    %v486 = vld [vmem:[#allocation2 + $0x90] sm:$0xff]
    %v487 = vld [vmem:[#allocation2 + $0x98] sm:$0xff]
    %v488 = vld [vmem:[#allocation2 + $0xa0] sm:$0xff]
    %v489 = vld [vmem:[#allocation2 + $0xa8] sm:$0xff]
    %v490 = vld [vmem:[#allocation2 + $0xb0] sm:$0xff]
    %v491 = vld [vmem:[#allocation2 + $0xb8] sm:$0xff]
    %v492 = vld [vmem:[#allocation2 + $0xc0] sm:$0xff]
    %v493 = vld [vmem:[#allocation2 + $0xc8] sm:$0xff]
    %v494 = vld [vmem:[#allocation2 + $0xd0] sm:$0xff]
    %v495 = vld [vmem:[#allocation2 + $0xd8] sm:$0xff]
    %v496 = vld [vmem:[#allocation2 + $0xe0] sm:$0xff]
    %v497 = vld [vmem:[#allocation2 + $0xe8] sm:$0xff]
    %v498 = vld [vmem:[#allocation2 + $0xf0] sm:$0xff]
    %v499 = vld [vmem:[#allocation2 + $0xf8] sm:$0xff]
    %v500 = vld [vmem:[%s8] sm:$0x3]
    %v502 = vlaneseq
    %v503 = vshrl.u32 %v502, 7
    %v504 = vsub.s32 0, %v503
    %v505 = vrot.slane %v500, %v504
    %v506 = vlaneseq
    %v507 = vshrl.u32 %v506, 7
    %v508 = vsub.s32 1, %v507
    %v509 = vrot.slane %v500, %v508
    %v544 = vunpack.c.l.b16 %v468
    %v545 = vunpack.c.h.b16 %v468
    %v546 = vunpack.c.l.b16 %v469
    %v547 = vunpack.c.h.b16 %v469
    %v548 = vunpack.c.l.b16 %v470
    %v549 = vunpack.c.h.b16 %v470
    %v550 = vunpack.c.l.b16 %v471
    %v551 = vunpack.c.h.b16 %v471
    %v552 = vunpack.c.l.b16 %v472
    %v553 = vunpack.c.h.b16 %v472
    %v554 = vunpack.c.l.b16 %v473
    %v555 = vunpack.c.h.b16 %v473
    %v556 = vunpack.c.l.b16 %v474
    %v557 = vunpack.c.h.b16 %v474
    %v558 = vunpack.c.l.b16 %v475
    %v559 = vunpack.c.h.b16 %v475
    %v560 = vunpack.c.l.b16 %v476
    %v561 = vunpack.c.h.b16 %v476
    %v562 = vunpack.c.l.b16 %v477
    %v563 = vunpack.c.h.b16 %v477
    %v564 = vunpack.c.l.b16 %v478
    %v565 = vunpack.c.h.b16 %v478
    %v566 = vunpack.c.l.b16 %v479
    %v567 = vunpack.c.h.b16 %v479
    %v568 = vunpack.c.l.b16 %v480
    %v569 = vunpack.c.h.b16 %v480
    %v570 = vunpack.c.l.b16 %v481
    %v571 = vunpack.c.h.b16 %v481
    %v572 = vunpack.c.l.b16 %v482
    %v573 = vunpack.c.h.b16 %v482
    %v574 = vunpack.c.l.b16 %v483
    %v575 = vunpack.c.h.b16 %v483
    %v576 = vunpack.c.l.b16 %v484
    %v577 = vunpack.c.h.b16 %v484
    %v578 = vunpack.c.l.b16 %v485
    %v579 = vunpack.c.h.b16 %v485
    %v580 = vunpack.c.l.b16 %v486
    %v581 = vunpack.c.h.b16 %v486
    %v582 = vunpack.c.l.b16 %v487
    %v583 = vunpack.c.h.b16 %v487
    %v584 = vunpack.c.l.b16 %v488
    %v585 = vunpack.c.h.b16 %v488
    %v586 = vunpack.c.l.b16 %v489
    %v587 = vunpack.c.h.b16 %v489
    %v588 = vunpack.c.l.b16 %v490
    %v589 = vunpack.c.h.b16 %v490
    %v590 = vunpack.c.l.b16 %v491
    %v591 = vunpack.c.h.b16 %v491
    %v592 = vunpack.c.l.b16 %v492
    %v593 = vunpack.c.h.b16 %v492
    %v594 = vunpack.c.l.b16 %v493
    %v595 = vunpack.c.h.b16 %v493
    %v596 = vunpack.c.l.b16 %v494
    %v597 = vunpack.c.h.b16 %v494
    %v598 = vunpack.c.l.b16 %v495
    %v599 = vunpack.c.h.b16 %v495
    %v600 = vunpack.c.l.b16 %v496
    %v601 = vunpack.c.h.b16 %v496
    %v602 = vunpack.c.l.b16 %v497
    %v603 = vunpack.c.h.b16 %v497
    %v604 = vunpack.c.l.b16 %v498
    %v605 = vunpack.c.h.b16 %v498
    %v606 = vunpack.c.l.b16 %v499
    %v607 = vunpack.c.h.b16 %v499
    %v608 = vpack.c.b16 %v546, %v544
    %v609 = vpack.c.b16 %v547, %v545
    %v610 = vpack.c.b16 %v550, %v548
    %v611 = vpack.c.b16 %v551, %v549
    %v612 = vpack.c.b16 %v554, %v552
    %v613 = vpack.c.b16 %v555, %v553
    %v614 = vpack.c.b16 %v558, %v556
    %v615 = vpack.c.b16 %v559, %v557
    %v616 = vpack.c.b16 %v562, %v560
    %v617 = vpack.c.b16 %v563, %v561
    %v618 = vpack.c.b16 %v566, %v564
    %v619 = vpack.c.b16 %v567, %v565
    %v620 = vpack.c.b16 %v570, %v568
    %v621 = vpack.c.b16 %v571, %v569
    %v622 = vpack.c.b16 %v574, %v572
    %v623 = vpack.c.b16 %v575, %v573
    %v624 = vpack.c.b16 %v578, %v576
    %v625 = vpack.c.b16 %v579, %v577
    %v626 = vpack.c.b16 %v582, %v580
    %v627 = vpack.c.b16 %v583, %v581
    %v628 = vpack.c.b16 %v586, %v584
    %v629 = vpack.c.b16 %v587, %v585
    %v630 = vpack.c.b16 %v590, %v588
    %v631 = vpack.c.b16 %v591, %v589
    %v632 = vpack.c.b16 %v594, %v592
    %v633 = vpack.c.b16 %v595, %v593
    %v634 = vpack.c.b16 %v598, %v596
    %v635 = vpack.c.b16 %v599, %v597
    %v636 = vpack.c.b16 %v602, %v600
    %v637 = vpack.c.b16 %v603, %v601
    %v638 = vpack.c.b16 %v606, %v604
    %v639 = vpack.c.b16 %v607, %v605
    %672 = vmatprep.subr.bf16.mxu0 %v623
    %673 = vmatpush1.bf16.msra.mxu0 %v622
    %674 = vmatprep.subr.bf16.mxu0 %v621
    %675 = vmatpush1.bf16.msra.mxu0 %v620
    %676 = vmatprep.subr.bf16.mxu0 %v619
    %677 = vmatpush1.bf16.msra.mxu0 %v618
    %678 = vmatprep.subr.bf16.mxu0 %v617
    %679 = vmatpush1.bf16.msra.mxu0 %v616
    %680 = vmatprep.subr.bf16.mxu0 %v615
    %681 = vmatpush1.bf16.msra.mxu0 %v614
    %682 = vmatprep.subr.bf16.mxu0 %v613
    %683 = vmatpush1.bf16.msra.mxu0 %v612
    %684 = vmatprep.subr.bf16.mxu0 %v611
    %685 = vmatpush1.bf16.msra.mxu0 %v610
    %686 = vmatprep.subr.bf16.mxu0 %v609
    %687 = vmatpush1.bf16.msra.mxu0 %v608
    %688 = vmatprep.subr.bf16.mxu0 %v639
    %689 = vmatpush2.bf16.msra.mxu0 %v638
    %690 = vmatprep.subr.bf16.mxu0 %v637
    %691 = vmatpush2.bf16.msra.mxu0 %v636
    %692 = vmatprep.subr.bf16.mxu0 %v635
    %693 = vmatpush2.bf16.msra.mxu0 %v634
    %694 = vmatprep.subr.bf16.mxu0 %v633
    %695 = vmatpush2.bf16.msra.mxu0 %v632
    %696 = vmatprep.subr.bf16.mxu0 %v631
    %697 = vmatpush2.bf16.msra.mxu0 %v630
    %698 = vmatprep.subr.bf16.mxu0 %v629
    %699 = vmatpush2.bf16.msra.mxu0 %v628
    %700 = vmatprep.subr.bf16.mxu0 %v627
    %701 = vmatpush2.bf16.msra.mxu0 %v626
    %702 = vmatprep.subr.bf16.mxu0 %v625
    %703 = vmatpush2.bf16.msra.mxu0 %v624
    %704 = vmatprep.mubr.bf16.mxu0 %v290
    %705 = vmatmul.mubr.bf16.gmra.mxu0 %v289
    %v706 = vpop.f32.mrf.mxu0
    %v707 = vadd.f32 %v505, %v706
    %v708 = vpop.f32.mrf.mxu0
    %v709 = vadd.f32 %v509, %v708
    %v710 = vpop.f32.mrf.mxu0
    %v711 = vpop.f32.mrf.mxu0
    %712 = vdwg.mxu0
    %v713 = vmax.f32 %v707, 0.0
    %v714 = vmax.f32 %v709, 0.0
    %v715 = vpack.c.bf16 %v713, %v713
    %v716 = vpack.c.bf16 %v714, %v714
    %v717 = vld [vmem:[#allocation5] sm:$0xf]
    %v718 = vld [vmem:[#allocation5 + $0x4] sm:$0xf]
    %v719 = vld [vmem:[#allocation5 + $0x8] sm:$0xf]
    %v720 = vld [vmem:[#allocation5 + $0xc] sm:$0xf]
    %v721 = vld [vmem:[#allocation5 + $0x10] sm:$0xf]
    %v722 = vld [vmem:[#allocation5 + $0x14] sm:$0xf]
    %v723 = vld [vmem:[#allocation5 + $0x18] sm:$0xf]
    %v724 = vld [vmem:[#allocation5 + $0x1c] sm:$0xf]
    %v725 = vld [vmem:[#allocation5 + $0x20] sm:$0xf]
    %v726 = vld [vmem:[#allocation5 + $0x24] sm:$0xf]
    %v727 = vld [vmem:[#allocation5 + $0x28] sm:$0xf]
    %v728 = vld [vmem:[#allocation5 + $0x2c] sm:$0xf]
    %v729 = vld [vmem:[#allocation5 + $0x30] sm:$0xf]
    %v730 = vld [vmem:[#allocation5 + $0x34] sm:$0xf]
    %v731 = vld [vmem:[#allocation5 + $0x38] sm:$0xf]
    %v732 = vld [vmem:[#allocation5 + $0x3c] sm:$0xf]
    %v733 = vld [vmem:[#allocation5 + $0x40] sm:$0xf]
    %v734 = vld [vmem:[#allocation5 + $0x44] sm:$0xf]
    %v735 = vld [vmem:[#allocation5 + $0x48] sm:$0xf]
    %v736 = vld [vmem:[#allocation5 + $0x4c] sm:$0xf]
    %v737 = vld [vmem:[#allocation5 + $0x50] sm:$0xf]
    %v738 = vld [vmem:[#allocation5 + $0x54] sm:$0xf]
    %v739 = vld [vmem:[#allocation5 + $0x58] sm:$0xf]
    %v740 = vld [vmem:[#allocation5 + $0x5c] sm:$0xf]
    %v741 = vld [vmem:[#allocation5 + $0x60] sm:$0xf]
    %v742 = vld [vmem:[#allocation5 + $0x64] sm:$0xf]
    %v743 = vld [vmem:[#allocation5 + $0x68] sm:$0xf]
    %v744 = vld [vmem:[#allocation5 + $0x6c] sm:$0xf]
    %v745 = vld [vmem:[#allocation5 + $0x70] sm:$0xf]
    %v746 = vld [vmem:[#allocation5 + $0x74] sm:$0xf]
    %v747 = vld [vmem:[#allocation5 + $0x78] sm:$0xf]
    %v748 = vld [vmem:[#allocation5 + $0x7c] sm:$0xf]
    %v749 = vld [vmem:[%s10] sm:$0x1]
    %v751 = vlaneseq
    %v752 = vshrl.u32 %v751, 7
    %v753 = vsub.s32 0, %v752
    %v754 = vrot.slane %v749, %v753
    %v788 = vunpack.c.l.b16 %v717
    %v789 = vunpack.c.l.b16 %v718
    %v790 = vunpack.c.l.b16 %v719
    %v791 = vunpack.c.l.b16 %v720
    %v792 = vunpack.c.l.b16 %v721
    %v793 = vunpack.c.l.b16 %v722
    %v794 = vunpack.c.l.b16 %v723
    %v795 = vunpack.c.l.b16 %v724
    %v796 = vunpack.c.l.b16 %v725
    %v797 = vunpack.c.l.b16 %v726
    %v798 = vunpack.c.l.b16 %v727
    %v799 = vunpack.c.l.b16 %v728
    %v800 = vunpack.c.l.b16 %v729
    %v801 = vunpack.c.l.b16 %v730
    %v802 = vunpack.c.l.b16 %v731
    %v803 = vunpack.c.l.b16 %v732
    %v804 = vunpack.c.l.b16 %v733
    %v805 = vunpack.c.l.b16 %v734
    %v806 = vunpack.c.l.b16 %v735
    %v807 = vunpack.c.l.b16 %v736
    %v808 = vunpack.c.l.b16 %v737
    %v809 = vunpack.c.l.b16 %v738
    %v810 = vunpack.c.l.b16 %v739
    %v811 = vunpack.c.l.b16 %v740
    %v812 = vunpack.c.l.b16 %v741
    %v813 = vunpack.c.l.b16 %v742
    %v814 = vunpack.c.l.b16 %v743
    %v815 = vunpack.c.l.b16 %v744
    %v816 = vunpack.c.l.b16 %v745
    %v817 = vunpack.c.l.b16 %v746
    %v818 = vunpack.c.l.b16 %v747
    %v819 = vunpack.c.l.b16 %v748
    %v820 = vpack.c.b16 %v789, %v788
    %v821 = vpack.c.b16 %v791, %v790
    %v822 = vpack.c.b16 %v793, %v792
    %v823 = vpack.c.b16 %v795, %v794
    %v824 = vpack.c.b16 %v797, %v796
    %v825 = vpack.c.b16 %v799, %v798
    %v826 = vpack.c.b16 %v801, %v800
    %v827 = vpack.c.b16 %v803, %v802
    %v828 = vpack.c.b16 %v805, %v804
    %v829 = vpack.c.b16 %v807, %v806
    %v830 = vpack.c.b16 %v809, %v808
    %v831 = vpack.c.b16 %v811, %v810
    %v832 = vpack.c.b16 %v813, %v812
    %v833 = vpack.c.b16 %v815, %v814
    %v834 = vpack.c.b16 %v817, %v816
    %v835 = vpack.c.b16 %v819, %v818
    %852 = vmatprep.subr.bf16.mxu0 0
    %853 = vmatpush1.bf16.msra.mxu0 %v827
    %854 = vmatprep.subr.bf16.mxu0 0
    %855 = vmatpush1.bf16.msra.mxu0 %v826
    %856 = vmatprep.subr.bf16.mxu0 0
    %857 = vmatpush1.bf16.msra.mxu0 %v825
    %858 = vmatprep.subr.bf16.mxu0 0
    %859 = vmatpush1.bf16.msra.mxu0 %v824
    %860 = vmatprep.subr.bf16.mxu0 0
    %861 = vmatpush1.bf16.msra.mxu0 %v823
    %862 = vmatprep.subr.bf16.mxu0 0
    %863 = vmatpush1.bf16.msra.mxu0 %v822
    %864 = vmatprep.subr.bf16.mxu0 0
    %865 = vmatpush1.bf16.msra.mxu0 %v821
    %866 = vmatprep.subr.bf16.mxu0 0
    %867 = vmatpush1.bf16.msra.mxu0 %v820
    %868 = vmatprep.subr.bf16.mxu0 0
    %869 = vmatpush2.bf16.msra.mxu0 %v835
    %870 = vmatprep.subr.bf16.mxu0 0
    %871 = vmatpush2.bf16.msra.mxu0 %v834
    %872 = vmatprep.subr.bf16.mxu0 0
    %873 = vmatpush2.bf16.msra.mxu0 %v833
    %874 = vmatprep.subr.bf16.mxu0 0
    %875 = vmatpush2.bf16.msra.mxu0 %v832
    %876 = vmatprep.subr.bf16.mxu0 0
    %877 = vmatpush2.bf16.msra.mxu0 %v831
    %878 = vmatprep.subr.bf16.mxu0 0
    %879 = vmatpush2.bf16.msra.mxu0 %v830
    %880 = vmatprep.subr.bf16.mxu0 0
    %881 = vmatpush2.bf16.msra.mxu0 %v829
    %882 = vmatprep.subr.bf16.mxu0 0
    %883 = vmatpush2.bf16.msra.mxu0 %v828
    %884 = vmatprep.mubr.bf16.mxu0 %v716
    %885 = vmatmul.mubr.bf16.gmra.mxu0 %v715
    %v886 = vpop.f32.mrf.mxu0
    %v887 = vadd.f32 %v754, %v886
    %v888 = vpop.f32.mrf.mxu0
    %v889 = vpop.f32.mrf.mxu0
    %v890 = vpop.f32.mrf.mxu0
    %891 = vdwg.mxu0
    %v892 = vmax.f32 %v887, 0.0
    %v893 = vpack.c.bf16 %v892, %v892
    %v894 = vld [vmem:[%s11] sm:$0xf]
    %v895 = vld [vmem:[%s11 + $0x4] sm:$0xf]
    %v896 = vld [vmem:[%s11 + $0x8] sm:$0xf]
    %v897 = vld [vmem:[%s11 + $0xc] sm:$0xf]
    %v898 = vld [vmem:[%s11 + $0x10] sm:$0xf]
    %v899 = vld [vmem:[%s11 + $0x14] sm:$0xf]
    %v900 = vld [vmem:[%s11 + $0x18] sm:$0xf]
    %v901 = vld [vmem:[%s11 + $0x1c] sm:$0xf]
    %v902 = vld [vmem:[%s11 + $0x20] sm:$0xf]
    %v903 = vld [vmem:[%s11 + $0x24] sm:$0xf]
    %v904 = vld [vmem:[%s11 + $0x28] sm:$0xf]
    %v905 = vld [vmem:[%s11 + $0x2c] sm:$0xf]
    %v906 = vld [vmem:[%s11 + $0x30] sm:$0xf]
    %v907 = vld [vmem:[%s11 + $0x34] sm:$0xf]
    %v908 = vld [vmem:[%s11 + $0x38] sm:$0xf]
    %v909 = vld [vmem:[%s11 + $0x3c] sm:$0xf]
    %v910 = vld [vmem:[%s12] sm:$0x1]
    %v912 = vlaneseq
    %v913 = vshrl.u32 %v912, 7
    %v914 = vsub.s32 0, %v913
    %v915 = vrot.slane %v910, %v914
    %v933 = vunpack.c.l.b16 %v894
    %v934 = vunpack.c.l.b16 %v895
    %v935 = vunpack.c.l.b16 %v896
    %v936 = vunpack.c.l.b16 %v897
    %v937 = vunpack.c.l.b16 %v898
    %v938 = vunpack.c.l.b16 %v899
    %v939 = vunpack.c.l.b16 %v900
    %v940 = vunpack.c.l.b16 %v901
    %v941 = vunpack.c.l.b16 %v902
    %v942 = vunpack.c.l.b16 %v903
    %v943 = vunpack.c.l.b16 %v904
    %v944 = vunpack.c.l.b16 %v905
    %v945 = vunpack.c.l.b16 %v906
    %v946 = vunpack.c.l.b16 %v907
    %v947 = vunpack.c.l.b16 %v908
    %v948 = vunpack.c.l.b16 %v909
    %v949 = vpack.c.b16 %v934, %v933
    %v950 = vpack.c.b16 %v936, %v935
    %v951 = vpack.c.b16 %v938, %v937
    %v952 = vpack.c.b16 %v940, %v939
    %v953 = vpack.c.b16 %v942, %v941
    %v954 = vpack.c.b16 %v944, %v943
    %v955 = vpack.c.b16 %v946, %v945
    %v956 = vpack.c.b16 %v948, %v947
    %965 = vmatprep.subr.bf16.mxu0 0
    %966 = vmatpush1.bf16.msra.mxu0 %v956
    %967 = vmatprep.subr.bf16.mxu0 0
    %968 = vmatpush1.bf16.msra.mxu0 %v955
    %969 = vmatprep.subr.bf16.mxu0 0
    %970 = vmatpush1.bf16.msra.mxu0 %v954
    %971 = vmatprep.subr.bf16.mxu0 0
    %972 = vmatpush1.bf16.msra.mxu0 %v953
    %973 = vmatprep.subr.bf16.mxu0 0
    %974 = vmatpush1.bf16.msra.mxu0 %v952
    %975 = vmatprep.subr.bf16.mxu0 0
    %976 = vmatpush1.bf16.msra.mxu0 %v951
    %977 = vmatprep.subr.bf16.mxu0 0
    %978 = vmatpush1.bf16.msra.mxu0 %v950
    %979 = vmatprep.subr.bf16.mxu0 0
    %980 = vmatpush1.bf16.msra.mxu0 %v949
    %981 = vmatprep.subr.bf16.mxu0 0
    %982 = vmatpush2.bf16.msra.mxu0 0
    %983 = vmatprep.subr.bf16.mxu0 0
    %984 = vmatpush2.bf16.msra.mxu0 0
    %985 = vmatprep.subr.bf16.mxu0 0
    %986 = vmatpush2.bf16.msra.mxu0 0
    %987 = vmatprep.subr.bf16.mxu0 0
    %988 = vmatpush2.bf16.msra.mxu0 0
    %989 = vmatprep.subr.bf16.mxu0 0
    %990 = vmatpush2.bf16.msra.mxu0 0
    %991 = vmatprep.subr.bf16.mxu0 0
    %992 = vmatpush2.bf16.msra.mxu0 0
    %993 = vmatprep.subr.bf16.mxu0 0
    %994 = vmatpush2.bf16.msra.mxu0 0
    %995 = vmatprep.subr.bf16.mxu0 0
    %996 = vmatpush2.bf16.msra.mxu0 0
    %997 = vmatprep.mubr.bf16.mxu0 0
    %998 = vmatmul.mubr.bf16.gmra.mxu0 %v893
    %v999 = vpop.f32.mrf.mxu0
    %v1000 = vadd.f32 %v915, %v999
    %v1001 = vpop.f32.mrf.mxu0
    %v1002 = vpop.f32.mrf.mxu0
    %v1003 = vpop.f32.mrf.mxu0
    %1004 = vdwg.mxu0
    %v1005 = vtanh.pop %v1000
    %1006 = vst.msk [vmem:[#allocation7] sm:$0xff] %vm92, %v1005
    // Predicated region
    $region62: #{tpu_custom_call.1} parent=1 // pred_check
      _
    $region63: #{tpu_custom_call.1} parent=1 // pred_check_branch
      %1008 = sbr.rel (0) target = $region65
    $region64: #{tpu_custom_call.1} parent=1 // pred_region
      _
    $region65: #{tpu_custom_call.1} parent=1 // pred_fallthru
      _
    // Predicated region
    $region66: #{tpu_custom_call.1} parent=1 // pred_check
      _
    $region67: #{tpu_custom_call.1} parent=1 // pred_check_branch
      %1010 = sbr.rel (0) target = $region69
    $region68: #{tpu_custom_call.1} parent=1 // pred_region
      %s1012 = ssub.s32 128, 128
      %1013 = vsyncadd [#allocation4], %s1012
      %s1015 = sshll.u32 [#allocation7], 4
      %s1016 = int_to_ptr.vmem [resolvable:$true] %s1015
      %1018 = dma.vmem_to_hbm [thread:$0]  %s1016, 128, %s14, [#allocation4]
    $region69: #{tpu_custom_call.1} parent=1 // pred_fallthru
      _
    // Predicated region
    $region70: #{tpu_custom_call.1} parent=1 // pred_check
      _
    $region71: #{tpu_custom_call.1} parent=1 // pred_check_branch
      %1020 = sbr.rel (0) target = $region73
    $region72: #{tpu_custom_call.1} parent=1 // pred_region
      _
    $region73: #{tpu_custom_call.1} parent=1 // pred_fallthru
      _
    // Predicated region
    $region74: #{tpu_custom_call.1} parent=1 // pred_check
      _
    $region75: #{tpu_custom_call.1} parent=1 // pred_check_branch
      %1022 = sbr.rel (0) target = $region77
    $region76: #{tpu_custom_call.1} parent=1 // pred_region
      %1023 = dma.done [#allocation4], 128
    $region77: #{tpu_custom_call.1} parent=1 // pred_fallthru
      _
    %1024 = vsyncpa [#allocation3], 1
    %1025 = vsyncpa [#allocation6], 1
    %1026 = vsyncpa [#allocation4], 1

</llo_original>
